<compile_context>
chip_gen: v5e
topology: v5e:2x2
jax: 0.10.0
libtpu: 0.0.40
codegen_flags: <defaults>
</compile_context>

<pallas_src>
import jax
import jax.numpy as jnp
from jax.experimental import pallas as pl
from jax.experimental.pallas import tpu as pltpu

_LANE = 128


def _pnet_kernel(x_ref, w1_ref, b1_ref, w2_ref, b2_ref, o_ref):
    # hidden = relu(x @ W1 + b1), f32 accumulation on the MXU
    h = jnp.dot(x_ref[...], w1_ref[...], preferred_element_type=jnp.float32)
    h = jnp.maximum(h + b1_ref[...], 0.0)
    # logits = hidden @ W2 + b2  (W2/b2 zero-padded to 128 lane-dense columns)
    out = jnp.dot(h, w2_ref[...], preferred_element_type=jnp.float32) + b2_ref[...]
    o_ref[...] = out.astype(o_ref.dtype)


def _round_up(x, m):
    return ((x + m - 1) // m) * m


def pnetwork_forward_batched(X, w1, b1, w2, b2, *, tile_m=1024):
    """X: (B, D) float32 -> logits: (B, K) float32 via a Pallas TPU kernel.

    Grid iterates over batch tiles (one step for B <= tile_m); weights/biases
    are VMEM-resident full-array blocks with constant index_maps.  The output
    is written lane-dense (128 columns) and sliced back to K in the wrapper.
    """
    B, D = X.shape
    hidden = w1.shape[1]
    K = w2.shape[1]

    # Batch tile: multiple of 8 sublanes, whole batch in one step when it fits
    # under tile_m; pad B up to a tile multiple so every block is full.
    tile_m = max(8, (int(tile_m) // 8) * 8)
    tm = min(tile_m, _round_up(B, 8))
    Bp = _round_up(B, tm)
    if Bp != B:
        X = jnp.pad(X, ((0, Bp - B), (0, 0)))

    # Lane-dense output: pad K up to a full 128-lane width with zero columns.
    # Padded columns are exact zeros (zero W2 cols, zero b2 entries) and are
    # sliced off below, so real outputs are unaffected.
    Kp = _round_up(K, _LANE)
    if Kp != K:
        w2 = jnp.pad(w2, ((0, 0), (0, Kp - K)))
        b2 = jnp.pad(b2, ((0, Kp - K),))

    b1_2d = b1.reshape(1, hidden)
    b2_2d = b2.reshape(1, Kp)

    out = pl.pallas_call(
        _pnet_kernel,
        out_shape=jax.ShapeDtypeStruct((Bp, Kp), jnp.float32),
        grid=(Bp // tm,),
        in_specs=[
            pl.BlockSpec((tm, D), lambda i: (i, 0)),       # x tile (pipelined)
            pl.BlockSpec((D, hidden), lambda i: (0, 0)),   # W1 (VMEM-resident)
            pl.BlockSpec((1, hidden), lambda i: (0, 0)),   # b1 (VMEM-resident)
            pl.BlockSpec((hidden, Kp), lambda i: (0, 0)),  # W2 (VMEM-resident)
            pl.BlockSpec((1, Kp), lambda i: (0, 0)),       # b2 (VMEM-resident)
        ],
        out_specs=pl.BlockSpec((tm, Kp), lambda i: (i, 0)),
        compiler_params=pltpu.CompilerParams(
            dimension_semantics=("parallel",),
        ),
    )(X, w1, b1_2d, w2, b2_2d)

    return out[:B, :K]


def pnetwork_forward(H, w1, b1, w2, b2):
    """Original PNetwork.forward semantics: H (D,) -> logits (K,).

    A single 16-element histogram is ~1.5 KFLOP; Pallas launch + DMA overhead
    dwarfs the compute, so this path is plain jnp (XLA-fused), as recommended.
    Batched callers should use `pnetwork_forward_batched`.
    """
    h = jnp.maximum(H @ w1 + b1, 0.0)
    return h @ w2 + b2


def init_pnetwork_params(key, input_dim, output_dim, hidden_dim=128):
    """Deterministic init mimicking torch.nn.Linear default (uniform +-1/sqrt(fan_in)).
    Weights are returned pre-transposed to (in, out) layout."""
    k1, k2, k3, k4 = jax.random.split(key, 4)
    bound1 = 1.0 / (input_dim ** 0.5)
    bound2 = 1.0 / (hidden_dim ** 0.5)
    w1 = jax.random.uniform(k1, (input_dim, hidden_dim), jnp.float32, -bound1, bound1)
    b1 = jax.random.uniform(k2, (hidden_dim,), jnp.float32, -bound1, bound1)
    w2 = jax.random.uniform(k3, (hidden_dim, output_dim), jnp.float32, -bound2, bound2)
    b2 = jax.random.uniform(k4, (output_dim,), jnp.float32, -bound2, bound2)
    return w1, b1, w2, b2


# TODO(synk): torch.optim.Adam / training step from the original module is not
# part of the forward pass and is not implemented here.

if __name__ == "__main__":
    input_dim = 16    # histogram length D
    output_dim = 8    # K classes
    hidden_dim = 32
    batch = 200       # multiple of 8 but not of 128 -> single large-tile grid step

    key = jax.random.PRNGKey(0)
    pkey, xkey, hkey = jax.random.split(key, 3)

    w1, b1, w2, b2 = init_pnetwork_params(pkey, input_dim, output_dim, hidden_dim)

    # Batched Pallas path: many histograms in one kernel launch (one grid step).
    X = jax.random.uniform(xkey, (batch, input_dim), jnp.float32)
    logits_b = jax.block_until_ready(pnetwork_forward_batched(X, w1, b1, w2, b2))
    ref_b = jnp.maximum(X @ w1 + b1, 0.0) @ w2 + b2
    assert logits_b.shape == (batch, output_dim)
    assert jnp.allclose(logits_b, ref_b, atol=1e-5), "batched mismatch vs reference"

    # Multi-step grid path (exercises batch tiling + padding through Pallas).
    logits_t = jax.block_until_ready(
        pnetwork_forward_batched(X, w1, b1, w2, b2, tile_m=64))
    assert jnp.allclose(logits_t, ref_b, atol=1e-5), "tiled mismatch vs reference"

    # Single-histogram path (original module semantics), plain jnp.
    H = jax.random.uniform(hkey, (input_dim,), jnp.float32)
    logits = jax.block_until_ready(pnetwork_forward(H, w1, b1, w2, b2))
    ref = jnp.maximum(H.reshape(1, -1) @ w1 + b1, 0.0) @ w2 + b2
    assert logits.shape == (output_dim,)
    assert jnp.allclose(logits, ref.reshape(-1), atol=1e-5), "single-sample mismatch"

    print("KERNEL_OK")
</pallas_src>

<mosaic_0001>
module attributes {stable_mosaic.version = 11 : i64} {
  func.func @_pnet_kernel(%arg0: i32, %arg1: memref<200x16xf32, #tpu.memory_space<vmem>>, %arg2: memref<16x32xf32, #tpu.memory_space<vmem>>, %arg3: memref<1x32xf32, #tpu.memory_space<vmem>>, %arg4: memref<32x128xf32, #tpu.memory_space<vmem>>, %arg5: memref<1x128xf32, #tpu.memory_space<vmem>>, %arg6: memref<200x128xf32, #tpu.memory_space<vmem>>) attributes {dimension_semantics = [#tpu.dimension_semantics<parallel>], iteration_bounds = array<i64: 1>, scalar_prefetch = 0 : i64, scratch_operands = 0 : i64, tpu.core_type = #tpu.core_type<tc>, window_params = [{transform_indices = @transform_0, window_bounds = array<i64: 200, 16>}, {pipeline_mode = #tpu.pipeline_mode<synchronous>, transform_indices = @transform_1, window_bounds = array<i64: 16, 32>}, {pipeline_mode = #tpu.pipeline_mode<synchronous>, transform_indices = @transform_2, window_bounds = array<i64: 1, 32>}, {pipeline_mode = #tpu.pipeline_mode<synchronous>, transform_indices = @transform_3, window_bounds = array<i64: 32, 128>}, {pipeline_mode = #tpu.pipeline_mode<synchronous>, transform_indices = @transform_4, window_bounds = array<i64: 1, 128>}, {transform_indices = @transform_5, window_bounds = array<i64: 200, 128>}]} {
    %c0 = arith.constant 0 : index
    %c0_0 = arith.constant 0 : index
    %0 = vector.load %arg1[%c0, %c0_0] : memref<200x16xf32, #tpu.memory_space<vmem>>, vector<200x16xf32>
    %c0_1 = arith.constant 0 : index
    %c0_2 = arith.constant 0 : index
    %1 = vector.load %arg2[%c0_1, %c0_2] : memref<16x32xf32, #tpu.memory_space<vmem>>, vector<16x32xf32>
    %cst = arith.constant dense<0.000000e+00> : vector<200x32xf32>
    %2 = tpu.matmul %0, %1, %cst {dimension_numbers = #tpu.dot_dimension_numbers<[1], [0], [0], [1], [0, 0, 1, 1], [], []>} : vector<200x16xf32>, vector<16x32xf32>, vector<200x32xf32> -> vector<200x32xf32>
    %c0_3 = arith.constant 0 : index
    %c0_4 = arith.constant 0 : index
    %3 = vector.load %arg3[%c0_3, %c0_4] : memref<1x32xf32, #tpu.memory_space<vmem>>, vector<1x32xf32>
    %4 = vector.broadcast %3 : vector<1x32xf32> to vector<200x32xf32>
    %5 = arith.addf %2, %4 : vector<200x32xf32>
    %cst_5 = arith.constant 0.000000e+00 : f32
    %6 = vector.broadcast %cst_5 : f32 to vector<200x32xf32>
    %7 = arith.maximumf %5, %6 : vector<200x32xf32>
    %c0_6 = arith.constant 0 : index
    %c0_7 = arith.constant 0 : index
    %8 = vector.load %arg4[%c0_6, %c0_7] : memref<32x128xf32, #tpu.memory_space<vmem>>, vector<32x128xf32>
    %cst_8 = arith.constant dense<0.000000e+00> : vector<200x128xf32>
    %9 = tpu.matmul %7, %8, %cst_8 {dimension_numbers = #tpu.dot_dimension_numbers<[1], [0], [0], [1], [0, 0, 1, 1], [], []>} : vector<200x32xf32>, vector<32x128xf32>, vector<200x128xf32> -> vector<200x128xf32>
    %c0_9 = arith.constant 0 : index
    %c0_10 = arith.constant 0 : index
    %10 = vector.load %arg5[%c0_9, %c0_10] : memref<1x128xf32, #tpu.memory_space<vmem>>, vector<1x128xf32>
    %11 = vector.broadcast %10 : vector<1x128xf32> to vector<200x128xf32>
    %12 = arith.addf %9, %11 : vector<200x128xf32>
    %c0_11 = arith.constant 0 : index
    %c0_12 = arith.constant 0 : index
    %13 = vector.load %arg6[%c0_11, %c0_12] : memref<200x128xf32, #tpu.memory_space<vmem>>, vector<200x128xf32>
    tpu.vector_store %arg6[%c0_11, %c0_12], %12 {strides = array<i32>} : memref<200x128xf32, #tpu.memory_space<vmem>>, vector<200x128xf32>,
    return
  }
  func.func @transform_0(%arg0: i32) -> (i32, i32) {
    %c0_i32 = arith.constant 0 : i32
    %c0_i32_0 = arith.constant 0 : i32
    return %arg0, %c0_i32 : i32, i32
  }
  func.func @transform_1(%arg0: i32) -> (i32, i32) {
    %c0_i32 = arith.constant 0 : i32
    %c0_i32_0 = arith.constant 0 : i32
    %c0_i32_1 = arith.constant 0 : i32
    return %c0_i32, %c0_i32_0 : i32, i32
  }
  func.func @transform_2(%arg0: i32) -> (i32, i32) {
    %c0_i32 = arith.constant 0 : i32
    %c0_i32_0 = arith.constant 0 : i32
    %c0_i32_1 = arith.constant 0 : i32
    return %c0_i32, %c0_i32_0 : i32, i32
  }
  func.func @transform_3(%arg0: i32) -> (i32, i32) {
    %c0_i32 = arith.constant 0 : i32
    %c0_i32_0 = arith.constant 0 : i32
    %c0_i32_1 = arith.constant 0 : i32
    return %c0_i32, %c0_i32_0 : i32, i32
  }
  func.func @transform_4(%arg0: i32) -> (i32, i32) {
    %c0_i32 = arith.constant 0 : i32
    %c0_i32_0 = arith.constant 0 : i32
    %c0_i32_1 = arith.constant 0 : i32
    return %c0_i32, %c0_i32_0 : i32, i32
  }
  func.func @transform_5(%arg0: i32) -> (i32, i32) {
    %c0_i32 = arith.constant 0 : i32
    %c0_i32_0 = arith.constant 0 : i32
    return %arg0, %c0_i32 : i32, i32
  }
}

</mosaic_0001>

<llo_original>
// kernel: tpu_custom_call.1
$region0: #{tpu_custom_call.1}
  #allocation0 [shape = 'u32[]', space=smem, size = 0x4, offset = 0x4, fixed_abs, tag = 'smem constant byte address 0x4 - core index']
  #allocation1 [shape = 'u32[72,128]{1,0:T(1,128)}', space=vmem, size = 0x9000, scoped, tag = 'internal scratch']
  %s0 = inlined_call_operand.vmem [shape: f32[200,16], index: 0, kind: input, shape index: {}]
  %s1 = inlined_call_operand.vmem [shape: f32[16,32], index: 1, kind: input, shape index: {}]
  %s2 = inlined_call_operand.vmem [shape: f32[1,32], index: 2, kind: input, shape index: {}]
  %s3 = inlined_call_operand.vmem [shape: f32[32,128], index: 3, kind: input, shape index: {}]
  %s4 = inlined_call_operand.vmem [shape: f32[1,128], index: 4, kind: input, shape index: {}]
  %s5 = inlined_call_operand.hbm [shape: f32[200,128], index: 5, kind: output, shape index: {}]
  %s6 = sld [smem:[#allocation0]]
  $region30: #{tpu_custom_call.1} parent=0
    _
  %s8 = ssub.s32 1, %s6
  %s9 = scalar_select 0, %s8, %s6
  $region1: #{tpu_custom_call.1} parent=0
    #allocation2 [shape = 'u8[102400]{0}', space=vmem, size = 0x19000, scoped, tag = 'output window, operand 0, single buffered']
    #allocation3 [shape = 's32[1]{0}', space=sflag, size = 0x4, scoped, tag = 'scoped memory for tpu_custom_call.1']
    %10 = vsyncpa [#allocation3], 0
    // Predicated region
    $region2: #{tpu_custom_call.1} parent=1 // pred_check
      _
    $region3: #{tpu_custom_call.1} parent=1 // pred_check_branch
      %12 = sbr.rel (0) target = $region5
    $region4: #{tpu_custom_call.1} parent=1 // pred_region
      _
    $region5: #{tpu_custom_call.1} parent=1 // pred_fallthru
      _
    // Predicated region
    $region6: #{tpu_custom_call.1} parent=1 // pred_check
      _
    $region7: #{tpu_custom_call.1} parent=1 // pred_check_branch
      %14 = sbr.rel (0) target = $region9
    $region8: #{tpu_custom_call.1} parent=1 // pred_region
      _
    $region9: #{tpu_custom_call.1} parent=1 // pred_fallthru
      _
    // Predicated region
    $region10: #{tpu_custom_call.1} parent=1 // pred_check
      _
    $region11: #{tpu_custom_call.1} parent=1 // pred_check_branch
      %16 = sbr.rel (0) target = $region13
    $region12: #{tpu_custom_call.1} parent=1 // pred_region
      _
    $region13: #{tpu_custom_call.1} parent=1 // pred_fallthru
      _
    // Predicated region
    $region14: #{tpu_custom_call.1} parent=1 // pred_check
      _
    $region15: #{tpu_custom_call.1} parent=1 // pred_check_branch
      %18 = sbr.rel (0) target = $region17
    $region16: #{tpu_custom_call.1} parent=1 // pred_region
      _
    $region17: #{tpu_custom_call.1} parent=1 // pred_fallthru
      _
    // Predicated region
    $region18: #{tpu_custom_call.1} parent=1 // pred_check
      _
    $region19: #{tpu_custom_call.1} parent=1 // pred_check_branch
      %20 = sbr.rel (0) target = $region21
    $region20: #{tpu_custom_call.1} parent=1 // pred_region
      _
    $region21: #{tpu_custom_call.1} parent=1 // pred_fallthru
      _
    %v21 = vld [vmem:[%s0] sm:$0xff]
    %v22 = vld [vmem:[%s0 + $0x8] sm:$0xff]
    %v23 = vld [vmem:[%s0 + $0x10] sm:$0xff]
    %v24 = vld [vmem:[%s0 + $0x18] sm:$0xff]
    %v25 = vld [vmem:[%s0 + $0x20] sm:$0xff]
    %v26 = vld [vmem:[%s0 + $0x28] sm:$0xff]
    %v27 = vld [vmem:[%s0 + $0x30] sm:$0xff]
    %v28 = vld [vmem:[%s0 + $0x38] sm:$0xff]
    %v29 = vld [vmem:[%s0 + $0x40] sm:$0xff]
    %v30 = vld [vmem:[%s0 + $0x48] sm:$0xff]
    %v31 = vld [vmem:[%s0 + $0x50] sm:$0xff]
    %v32 = vld [vmem:[%s0 + $0x58] sm:$0xff]
    %v33 = vld [vmem:[%s0 + $0x60] sm:$0xff]
    %v34 = vld [vmem:[%s0 + $0x68] sm:$0xff]
    %v35 = vld [vmem:[%s0 + $0x70] sm:$0xff]
    %v36 = vld [vmem:[%s0 + $0x78] sm:$0xff]
    %v37 = vld [vmem:[%s0 + $0x80] sm:$0xff]
    %v38 = vld [vmem:[%s0 + $0x88] sm:$0xff]
    %v39 = vld [vmem:[%s0 + $0x90] sm:$0xff]
    %v40 = vld [vmem:[%s0 + $0x98] sm:$0xff]
    %v41 = vld [vmem:[%s0 + $0xa0] sm:$0xff]
    %v42 = vld [vmem:[%s0 + $0xa8] sm:$0xff]
    %v43 = vld [vmem:[%s0 + $0xb0] sm:$0xff]
    %v44 = vld [vmem:[%s0 + $0xb8] sm:$0xff]
    %v45 = vld [vmem:[%s0 + $0xc0] sm:$0xff]
    %v46 = vld [vmem:[%s1] sm:$0xff]
    %v47 = vld [vmem:[%s1 + $0x8] sm:$0xff]
    %v48 = vld [vmem:[%s2] sm:$0x1]
    %v50 = vperm.slane %v48, 0
    %vm52 = vcmask 130048
    %v54 = vsel %vm52, %v21, 0
    %v57 = vsel %vm52, %v22, 0
    %v60 = vsel %vm52, %v23, 0
    %v63 = vsel %vm52, %v24, 0
    %v66 = vsel %vm52, %v25, 0
    %v69 = vsel %vm52, %v26, 0
    %v72 = vsel %vm52, %v27, 0
    %v75 = vsel %vm52, %v28, 0
    %v78 = vsel %vm52, %v29, 0
    %v81 = vsel %vm52, %v30, 0
    %v84 = vsel %vm52, %v31, 0
    %v87 = vsel %vm52, %v32, 0
    %v90 = vsel %vm52, %v33, 0
    %v93 = vsel %vm52, %v34, 0
    %v96 = vsel %vm52, %v35, 0
    %v99 = vsel %vm52, %v36, 0
    %v102 = vsel %vm52, %v37, 0
    %v105 = vsel %vm52, %v38, 0
    %v108 = vsel %vm52, %v39, 0
    %v111 = vsel %vm52, %v40, 0
    %v114 = vsel %vm52, %v41, 0
    %v117 = vsel %vm52, %v42, 0
    %v120 = vsel %vm52, %v43, 0
    %v123 = vsel %vm52, %v44, 0
    %v126 = vsel %vm52, %v45, 0
    %128 = vmatpush.msra.mxu0 0.0
    %129 = vmatpush.msra.mxu0 0.0
    %130 = vmatpush.msra.mxu0 0.0
    %131 = vmatpush.msra.mxu0 0.0
    %132 = vmatpush.msra.mxu0 0.0
    %133 = vmatpush.msra.mxu0 0.0
    %134 = vmatpush.msra.mxu0 0.0
    %135 = vmatpush.msra.mxu0 0.0
    %136 = vmatpush.msra.mxu0 0.0
    %137 = vmatpush.msra.mxu0 0.0
    %138 = vmatpush.msra.mxu0 0.0
    %139 = vmatpush.msra.mxu0 0.0
    %140 = vmatpush.msra.mxu0 0.0
    %141 = vmatpush.msra.mxu0 0.0
    %142 = vmatpush.msra.mxu0 %v47
    %143 = vmatpush.msra.mxu0 %v46
    %144 = vmatmul.f32.gmra.mxu0 %v54
    %v145 = vpop.f32.mrf.mxu0
    %v146 = vadd.f32 %v50, %v145
    %147 = vmatmul.f32.gmra.mxu0 %v57
    %v148 = vpop.f32.mrf.mxu0
    %v149 = vadd.f32 %v50, %v148
    %150 = vmatmul.f32.gmra.mxu0 %v60
    %v151 = vpop.f32.mrf.mxu0
    %v152 = vadd.f32 %v50, %v151
    %153 = vmatmul.f32.gmra.mxu0 %v63
    %v154 = vpop.f32.mrf.mxu0
    %v155 = vadd.f32 %v50, %v154
    %156 = vmatmul.f32.gmra.mxu0 %v66
    %v157 = vpop.f32.mrf.mxu0
    %v158 = vadd.f32 %v50, %v157
    %159 = vmatmul.f32.gmra.mxu0 %v69
    %v160 = vpop.f32.mrf.mxu0
    %v161 = vadd.f32 %v50, %v160
    %162 = vmatmul.f32.gmra.mxu0 %v72
    %v163 = vpop.f32.mrf.mxu0
    %v164 = vadd.f32 %v50, %v163
    %165 = vmatmul.f32.gmra.mxu0 %v75
    %v166 = vpop.f32.mrf.mxu0
    %v167 = vadd.f32 %v50, %v166
    %168 = vmatmul.f32.gmra.mxu0 %v78
    %v169 = vpop.f32.mrf.mxu0
    %v170 = vadd.f32 %v50, %v169
    %171 = vmatmul.f32.gmra.mxu0 %v81
    %v172 = vpop.f32.mrf.mxu0
    %v173 = vadd.f32 %v50, %v172
    %174 = vmatmul.f32.gmra.mxu0 %v84
    %v175 = vpop.f32.mrf.mxu0
    %v176 = vadd.f32 %v50, %v175
    %177 = vmatmul.f32.gmra.mxu0 %v87
    %v178 = vpop.f32.mrf.mxu0
    %v179 = vadd.f32 %v50, %v178
    %180 = vmatmul.f32.gmra.mxu0 %v90
    %v181 = vpop.f32.mrf.mxu0
    %v182 = vadd.f32 %v50, %v181
    %183 = vmatmul.f32.gmra.mxu0 %v93
    %v184 = vpop.f32.mrf.mxu0
    %v185 = vadd.f32 %v50, %v184
    %186 = vmatmul.f32.gmra.mxu0 %v96
    %v187 = vpop.f32.mrf.mxu0
    %v188 = vadd.f32 %v50, %v187
    %189 = vmatmul.f32.gmra.mxu0 %v99
    %v190 = vpop.f32.mrf.mxu0
    %v191 = vadd.f32 %v50, %v190
    %192 = vmatmul.f32.gmra.mxu0 %v102
    %v193 = vpop.f32.mrf.mxu0
    %v194 = vadd.f32 %v50, %v193
    %195 = vmatmul.f32.gmra.mxu0 %v105
    %v196 = vpop.f32.mrf.mxu0
    %v197 = vadd.f32 %v50, %v196
    %198 = vmatmul.f32.gmra.mxu0 %v108
    %v199 = vpop.f32.mrf.mxu0
    %v200 = vadd.f32 %v50, %v199
    %201 = vmatmul.f32.gmra.mxu0 %v111
    %v202 = vpop.f32.mrf.mxu0
    %v203 = vadd.f32 %v50, %v202
    %204 = vmatmul.f32.gmra.mxu0 %v114
    %v205 = vpop.f32.mrf.mxu0
    %v206 = vadd.f32 %v50, %v205
    %207 = vmatmul.f32.gmra.mxu0 %v117
    %v208 = vpop.f32.mrf.mxu0
    %v209 = vadd.f32 %v50, %v208
    %210 = vmatmul.f32.gmra.mxu0 %v120
    %v211 = vpop.f32.mrf.mxu0
    %v212 = vadd.f32 %v50, %v211
    %213 = vmatmul.f32.gmra.mxu0 %v123
    %v214 = vpop.f32.mrf.mxu0
    %v215 = vadd.f32 %v50, %v214
    %216 = vmatmul.f32.gmra.mxu0 %v126
    %v217 = vpop.f32.mrf.mxu0
    %v218 = vadd.f32 %v50, %v217
    %219 = vdwg.mxu0
    %v220 = vmax.f32 %v146, 0.0
    %v221 = vmax.f32 %v149, 0.0
    %v222 = vmax.f32 %v152, 0.0
    %v223 = vmax.f32 %v155, 0.0
    %v224 = vmax.f32 %v158, 0.0
    %v225 = vmax.f32 %v161, 0.0
    %v226 = vmax.f32 %v164, 0.0
    %v227 = vmax.f32 %v167, 0.0
    %v228 = vmax.f32 %v170, 0.0
    %v229 = vmax.f32 %v173, 0.0
    %v230 = vmax.f32 %v176, 0.0
    %v231 = vmax.f32 %v179, 0.0
    %v232 = vmax.f32 %v182, 0.0
    %v233 = vmax.f32 %v185, 0.0
    %v234 = vmax.f32 %v188, 0.0
    %v235 = vmax.f32 %v191, 0.0
    %v236 = vmax.f32 %v194, 0.0
    %v237 = vmax.f32 %v197, 0.0
    %v238 = vmax.f32 %v200, 0.0
    %v239 = vmax.f32 %v203, 0.0
    %v240 = vmax.f32 %v206, 0.0
    %v241 = vmax.f32 %v209, 0.0
    %v242 = vmax.f32 %v212, 0.0
    %v243 = vmax.f32 %v215, 0.0
    %v244 = vmax.f32 %v218, 0.0
    %v245 = vld [vmem:[%s3] sm:$0xff]
    %v246 = vld [vmem:[%s3 + $0x8] sm:$0xff]
    %v247 = vld [vmem:[%s3 + $0x10] sm:$0xff]
    %v248 = vld [vmem:[%s3 + $0x18] sm:$0xff]
    %v249 = vld [vmem:[%s4] sm:$0x1]
    %v251 = vperm.slane %v249, 0
    %vm253 = vcmask 261120
    %v255 = vsel %vm253, %v220, 0
    %v258 = vsel %vm253, %v221, 0
    %v261 = vsel %vm253, %v222, 0
    %v264 = vsel %vm253, %v223, 0
    %v267 = vsel %vm253, %v224, 0
    %v270 = vsel %vm253, %v225, 0
    %v273 = vsel %vm253, %v226, 0
    %v276 = vsel %vm253, %v227, 0
    %v279 = vsel %vm253, %v228, 0
    %v282 = vsel %vm253, %v229, 0
    %v285 = vsel %vm253, %v230, 0
    %v288 = vsel %vm253, %v231, 0
    %v291 = vsel %vm253, %v232, 0
    %v294 = vsel %vm253, %v233, 0
    %v297 = vsel %vm253, %v234, 0
    %v300 = vsel %vm253, %v235, 0
    %v303 = vsel %vm253, %v236, 0
    %v306 = vsel %vm253, %v237, 0
    %v309 = vsel %vm253, %v238, 0
    %v312 = vsel %vm253, %v239, 0
    %v315 = vsel %vm253, %v240, 0
    %v318 = vsel %vm253, %v241, 0
    %v321 = vsel %vm253, %v242, 0
    %v324 = vsel %vm253, %v243, 0
    %v327 = vsel %vm253, %v244, 0
    %329 = vmatpush.msra.mxu0 0.0
    %330 = vmatpush.msra.mxu0 0.0
    %331 = vmatpush.msra.mxu0 0.0
    %332 = vmatpush.msra.mxu0 0.0
    %333 = vmatpush.msra.mxu0 0.0
    %334 = vmatpush.msra.mxu0 0.0
    %335 = vmatpush.msra.mxu0 0.0
    %336 = vmatpush.msra.mxu0 0.0
    %337 = vmatpush.msra.mxu0 0.0
    %338 = vmatpush.msra.mxu0 0.0
    %339 = vmatpush.msra.mxu0 0.0
    %340 = vmatpush.msra.mxu0 0.0
    %341 = vmatpush.msra.mxu0 %v248
    %342 = vmatpush.msra.mxu0 %v247
    %343 = vmatpush.msra.mxu0 %v246
    %344 = vmatpush.msra.mxu0 %v245
    %345 = vmatmul.f32.gmra.mxu0 %v255
    %v346 = vpop.f32.mrf.mxu0
    %v347 = vadd.f32 %v251, %v346
    %348 = vmatmul.f32.gmra.mxu0 %v258
    %v349 = vpop.f32.mrf.mxu0
    %v350 = vadd.f32 %v251, %v349
    %351 = vmatmul.f32.gmra.mxu0 %v261
    %v352 = vpop.f32.mrf.mxu0
    %v353 = vadd.f32 %v251, %v352
    %354 = vmatmul.f32.gmra.mxu0 %v264
    %v355 = vpop.f32.mrf.mxu0
    %v356 = vadd.f32 %v251, %v355
    %357 = vmatmul.f32.gmra.mxu0 %v267
    %v358 = vpop.f32.mrf.mxu0
    %v359 = vadd.f32 %v251, %v358
    %360 = vmatmul.f32.gmra.mxu0 %v270
    %v361 = vpop.f32.mrf.mxu0
    %v362 = vadd.f32 %v251, %v361
    %363 = vmatmul.f32.gmra.mxu0 %v273
    %v364 = vpop.f32.mrf.mxu0
    %v365 = vadd.f32 %v251, %v364
    %366 = vmatmul.f32.gmra.mxu0 %v276
    %v367 = vpop.f32.mrf.mxu0
    %v368 = vadd.f32 %v251, %v367
    %369 = vmatmul.f32.gmra.mxu0 %v279
    %v370 = vpop.f32.mrf.mxu0
    %v371 = vadd.f32 %v251, %v370
    %372 = vmatmul.f32.gmra.mxu0 %v282
    %v373 = vpop.f32.mrf.mxu0
    %v374 = vadd.f32 %v251, %v373
    %375 = vmatmul.f32.gmra.mxu0 %v285
    %v376 = vpop.f32.mrf.mxu0
    %v377 = vadd.f32 %v251, %v376
    %378 = vmatmul.f32.gmra.mxu0 %v288
    %v379 = vpop.f32.mrf.mxu0
    %v380 = vadd.f32 %v251, %v379
    %381 = vmatmul.f32.gmra.mxu0 %v291
    %v382 = vpop.f32.mrf.mxu0
    %v383 = vadd.f32 %v251, %v382
    %384 = vmatmul.f32.gmra.mxu0 %v294
    %v385 = vpop.f32.mrf.mxu0
    %v386 = vadd.f32 %v251, %v385
    %387 = vmatmul.f32.gmra.mxu0 %v297
    %v388 = vpop.f32.mrf.mxu0
    %v389 = vadd.f32 %v251, %v388
    %390 = vmatmul.f32.gmra.mxu0 %v300
    %v391 = vpop.f32.mrf.mxu0
    %v392 = vadd.f32 %v251, %v391
    %393 = vmatmul.f32.gmra.mxu0 %v303
    %v394 = vpop.f32.mrf.mxu0
    %v395 = vadd.f32 %v251, %v394
    %396 = vmatmul.f32.gmra.mxu0 %v306
    %v397 = vpop.f32.mrf.mxu0
    %v398 = vadd.f32 %v251, %v397
    %399 = vmatmul.f32.gmra.mxu0 %v309
    %v400 = vpop.f32.mrf.mxu0
    %v401 = vadd.f32 %v251, %v400
    %402 = vmatmul.f32.gmra.mxu0 %v312
    %v403 = vpop.f32.mrf.mxu0
    %v404 = vadd.f32 %v251, %v403
    %405 = vmatmul.f32.gmra.mxu0 %v315
    %v406 = vpop.f32.mrf.mxu0
    %v407 = vadd.f32 %v251, %v406
    %408 = vmatmul.f32.gmra.mxu0 %v318
    %v409 = vpop.f32.mrf.mxu0
    %v410 = vadd.f32 %v251, %v409
    %411 = vmatmul.f32.gmra.mxu0 %v321
    %v412 = vpop.f32.mrf.mxu0
    %v413 = vadd.f32 %v251, %v412
    %414 = vmatmul.f32.gmra.mxu0 %v324
    %v415 = vpop.f32.mrf.mxu0
    %v416 = vadd.f32 %v251, %v415
    %417 = vmatmul.f32.gmra.mxu0 %v327
    %v418 = vpop.f32.mrf.mxu0
    %v419 = vadd.f32 %v251, %v418
    %420 = vdwg.mxu0
    %421 = vst [vmem:[#allocation2] sm:$0xff] %v347
    %422 = vst [vmem:[#allocation2 + $0x8] sm:$0xff] %v350
    %423 = vst [vmem:[#allocation2 + $0x10] sm:$0xff] %v353
    %424 = vst [vmem:[#allocation2 + $0x18] sm:$0xff] %v356
    %425 = vst [vmem:[#allocation2 + $0x20] sm:$0xff] %v359
    %426 = vst [vmem:[#allocation2 + $0x28] sm:$0xff] %v362
    %427 = vst [vmem:[#allocation2 + $0x30] sm:$0xff] %v365
    %428 = vst [vmem:[#allocation2 + $0x38] sm:$0xff] %v368
    %429 = vst [vmem:[#allocation2 + $0x40] sm:$0xff] %v371
    %430 = vst [vmem:[#allocation2 + $0x48] sm:$0xff] %v374
    %431 = vst [vmem:[#allocation2 + $0x50] sm:$0xff] %v377
    %432 = vst [vmem:[#allocation2 + $0x58] sm:$0xff] %v380
    %433 = vst [vmem:[#allocation2 + $0x60] sm:$0xff] %v383
    %434 = vst [vmem:[#allocation2 + $0x68] sm:$0xff] %v386
    %435 = vst [vmem:[#allocation2 + $0x70] sm:$0xff] %v389
    %436 = vst [vmem:[#allocation2 + $0x78] sm:$0xff] %v392
    %437 = vst [vmem:[#allocation2 + $0x80] sm:$0xff] %v395
    %438 = vst [vmem:[#allocation2 + $0x88] sm:$0xff] %v398
    %439 = vst [vmem:[#allocation2 + $0x90] sm:$0xff] %v401
    %440 = vst [vmem:[#allocation2 + $0x98] sm:$0xff] %v404
    %441 = vst [vmem:[#allocation2 + $0xa0] sm:$0xff] %v407
    %442 = vst [vmem:[#allocation2 + $0xa8] sm:$0xff] %v410
    %443 = vst [vmem:[#allocation2 + $0xb0] sm:$0xff] %v413
    %444 = vst [vmem:[#allocation2 + $0xb8] sm:$0xff] %v416
    %445 = vst [vmem:[#allocation2 + $0xc0] sm:$0xff] %v419
    // Predicated region
    $region22: #{tpu_custom_call.1} parent=1 // pred_check
      _
    $region23: #{tpu_custom_call.1} parent=1 // pred_check_branch
      %447 = sbr.rel (0) target = $region25
    $region24: #{tpu_custom_call.1} parent=1 // pred_region
      %449 = vsyncadd [#allocation3], 0
      %s450 = sshll.u32 [#allocation2], 4
      %s451 = int_to_ptr.vmem [resolvable:$true] %s450
      %s452 = sshll.u32 %s5, 4
      %s453 = int_to_ptr.hbm [resolvable:$true] %s452
      %458 = dma.vmem_to_hbm [thread:$0]  %s451, 3200, %s453, [#allocation3], 128, 128, 8
    $region25: #{tpu_custom_call.1} parent=1 // pred_fallthru
      _
    // Predicated region
    $region26: #{tpu_custom_call.1} parent=1 // pred_check
      _
    $region27: #{tpu_custom_call.1} parent=1 // pred_check_branch
      %460 = sbr.rel (0) target = $region29
    $region28: #{tpu_custom_call.1} parent=1 // pred_region
      %462 = dma.done [#allocation3], 3200
    $region29: #{tpu_custom_call.1} parent=1 // pred_fallthru
      _
    %463 = vsyncpa [#allocation3], 1

</llo_original>
